<compile_context>
chip_gen: v6e
topology: v6e:2x2x1
jax: 0.10.0
libtpu: 0.0.40
codegen_flags: <defaults>
</compile_context>

<pallas_src>
import functools

import jax
import jax.numpy as jnp
from jax import lax
from jax.experimental import pallas as pl
from jax.experimental.pallas import tpu as pltpu


# --------------------------------------------------------------------------
# Budget / tiling helpers
# --------------------------------------------------------------------------
def _vmem_capacity_bytes():
    """Per-core VMEM capacity, with a conservative fallback (v7x = 64 MiB)."""
    try:
        cap = int(pltpu.get_tpu_info().vmem_capacity_bytes)
        if cap > 0:
            return cap
    except Exception:
        pass
    return 64 << 20


def _input_block_budget(vmem_cap):
    # One pipelined input buffer gets ~1/4 of VMEM: 2 buffers -> ~1/2, leaving
    # headroom for output blocks, scratch and compiler-internal scratch.
    # v5e/v6e (128 MiB) -> 32 MiB/buffer, v7x (64 MiB) -> 16 MiB/buffer.
    return int(min(max(vmem_cap // 4, 1 << 20), 32 << 20))


def _pick_tn(n, bytes_per_image, budget):
    """Images per row block.

    tn must be a multiple of 8 or equal to n so the (tn, C) output block
    respects TPU sublane tiling.  For n > 8 we aim for >= 2 row blocks so the
    'parallel' grid axis shards across v7x's two TensorCores (a no-op cost on
    single-core v5e/v6e)."""
    if n <= 8:
        return n  # too small to split legally; whole batch in one block
    max_rows = max(8, budget // max(bytes_per_image, 1))
    tn = min(max_rows, max(8, n // 2))
    return max(8, (tn // 8) * 8)


def _vmem_limit(vmem_cap, in_block, out_block, scratch):
    needed = 2 * in_block + 2 * out_block + scratch + (2 << 20)
    return int(min(vmem_cap, max(needed, 16 << 20)))


# --------------------------------------------------------------------------
# Kernels
# --------------------------------------------------------------------------
def _style_kernel_spatial_lanes(x_ref, o_ref, acc_ref, *, hw, thw):
    """Blocks: x (tn, C, thw) with H*W on lanes; o / acc (tn, C).

    Grid = (image row blocks ["parallel"], spatial tiles ["arbitrary"])."""
    k = pl.program_id(1)

    @pl.when(k == 0)
    def _init():
        acc_ref[...] = jnp.zeros_like(acc_ref)

    x = x_ref[...].astype(jnp.float32)  # (tn, C, thw), f32 acc on all gens
    if hw % thw != 0:
        # Non-dividing spatial tile: zero the out-of-range tail lanes so the
        # padded garbage of the last block never reaches the accumulator.
        lane = lax.broadcasted_iota(jnp.int32, x.shape, 2)
        x = jnp.where(k * thw + lane < hw, x, 0.0)
    acc_ref[...] += jnp.sum(x, axis=-1)  # (tn, C) lane-axis reduce

    @pl.when(k == pl.num_programs(1) - 1)
    def _finalize():
        s = acc_ref[...]  # raw spatial sums; the 1/(H*W) scale cancels below
        sq = jnp.sum(s * s, axis=-1, keepdims=True)  # (tn, 1)
        o_ref[...] = (s * lax.rsqrt(sq)).astype(o_ref.dtype)


def _style_kernel_channel_lanes(x_ref, o_ref):
    """Blocks: x (tn, H*W, C) with C on lanes (deep-feature layout); o (tn, C)."""
    x = x_ref[...].astype(jnp.float32)            # (tn, HW, C)
    s = jnp.sum(x, axis=1)                        # (tn, C) sublane reduce
    sq = jnp.sum(s * s, axis=-1, keepdims=True)   # (tn, 1)
    o_ref[...] = (s * lax.rsqrt(sq)).astype(o_ref.dtype)


# --------------------------------------------------------------------------
# Wrapper
# --------------------------------------------------------------------------
def make_style(x, *, max_block_bytes=None):
    """Pallas implementation of makeStyle.forward. x: (N, C, H, W) -> (N, C)."""
    n, c, h, w = x.shape
    hw = h * w
    itemsize = jnp.dtype(x.dtype).itemsize

    vmem_cap = _vmem_capacity_bytes()
    budget = _input_block_budget(vmem_cap)
    if max_block_bytes is not None:  # test / tuning hook
        budget = int(max_block_bytes)

    cost = pl.CostEstimate(
        flops=int(2 * n * c * hw + 4 * n * c),
        transcendentals=int(n),
        bytes_accessed=int(n * c * hw * itemsize + n * c * itemsize),
    )

    if hw < 128 and c >= 128:
        # Deep-feature shapes (what CNNNet actually feeds this op:
        # embeddings[-1], e.g. C=256, 8x8).  Put C on lanes so every load and
        # the output store is a full 128-wide vreg; the spatial reduce becomes
        # a small sublane reduce.  The wrapper transpose is a relayout of a
        # tensor that is tiny compared with early-layer activations.
        x2 = jnp.transpose(x.reshape(n, c, hw), (0, 2, 1))  # (N, HW, C)
        img_bytes = hw * c * itemsize
        tn = _pick_tn(n, img_bytes, budget)
        in_block = tn * img_bytes
        out_block = tn * c * itemsize
        return pl.pallas_call(
            _style_kernel_channel_lanes,
            out_shape=jax.ShapeDtypeStruct((n, c), x.dtype),
            grid_spec=pltpu.PrefetchScalarGridSpec(
                num_scalar_prefetch=0,
                grid=(pl.cdiv(n, tn),),
                in_specs=[pl.BlockSpec((tn, hw, c), lambda i: (i, 0, 0))],
                out_specs=pl.BlockSpec((tn, c), lambda i: (i, 0)),
            ),
            compiler_params=pltpu.CompilerParams(
                dimension_semantics=("parallel",),
                vmem_limit_bytes=_vmem_limit(vmem_cap, in_block, out_block, 0),
            ),
            cost_estimate=cost,
        )(x2)

    # Spatial-on-lanes layout: free row-major collapse to (N, C, H*W) so the
    # big reduction axis sits on lanes.
    x2 = x.reshape(n, c, hw)
    row_bytes = c * hw * itemsize          # one image
    min_rows = n if n <= 8 else 8          # smallest legal tn

    if min_rows * row_bytes <= budget:
        # Whole spatial extent fits: one reduction step per row block; grow tn
        # under the budget (multi-MB steps amortize the ~0.35us step cost).
        thw = hw
        tn = _pick_tn(n, row_bytes, budget)
        k_grid = 1
    else:
        # Tile H*W in multiples of 128 lanes under the budget.
        tn = min_rows
        max_thw = max(128, (budget // max(tn * c * itemsize, 1)) // 128 * 128)
        if hw <= max_thw:
            thw = hw
        else:
            # Prefer an exact divisor (no tail masking) unless it would shrink
            # the tile by more than ~4x; otherwise mask the tail in-kernel.
            thw = max_thw
            for t in range(max_thw, max(127, max_thw // 4), -128):
                if hw % t == 0:
                    thw = t
                    break
        k_grid = pl.cdiv(hw, thw)

    in_block = tn * c * thw * itemsize
    out_block = tn * c * itemsize
    scratch = tn * c * 4

    kernel = functools.partial(_style_kernel_spatial_lanes, hw=hw, thw=thw)
    return pl.pallas_call(
        kernel,
        out_shape=jax.ShapeDtypeStruct((n, c), x.dtype),
        grid_spec=pltpu.PrefetchScalarGridSpec(
            num_scalar_prefetch=0,
            grid=(pl.cdiv(n, tn), k_grid),
            in_specs=[pl.BlockSpec((tn, c, thw), lambda i, k: (i, 0, k))],
            out_specs=pl.BlockSpec((tn, c), lambda i, k: (i, 0)),
            scratch_shapes=[pltpu.VMEM((tn, c), jnp.float32)],
        ),
        compiler_params=pltpu.CompilerParams(
            dimension_semantics=("parallel", "arbitrary"),
            vmem_limit_bytes=_vmem_limit(vmem_cap, in_block, out_block, scratch),
        ),
        cost_estimate=cost,
    )(x2)


def make_style_ref(x):
    """Pure-JAX reference mirroring the PyTorch module."""
    pooled = jnp.mean(x, axis=(-2, -1))  # (N, C)
    return pooled / jnp.sqrt(jnp.sum(pooled**2, axis=1, keepdims=True))


if __name__ == "__main__":
    root = jax.random.PRNGKey(0)
    k1, k2, k3, k4 = jax.random.split(root, 4)

    def _check(x, **kw):
        out = jax.block_until_ready(make_style(x, **kw))
        ref = make_style_ref(x)
        assert out.shape == ref.shape, (out.shape, ref.shape)
        assert jnp.allclose(out, ref, atol=1e-5, rtol=1e-4), (out, ref)

    # 1) Early-layer shape: H*W on lanes, single spatial block.
    _check(jax.random.normal(k1, (2, 4, 16, 16), dtype=jnp.float32))

    # 2) Forced tiny budget: exercises the tiled spatial reduction with a
    #    non-dividing tail (hw=400, thw=128 -> 4 tiles, 16-lane masked tail).
    _check(jax.random.normal(k2, (2, 4, 20, 20), dtype=jnp.float32),
           max_block_bytes=4096)

    # 3) Batch > 8: >= 2 row blocks on the "parallel" axis (v7x megacore path).
    _check(jax.random.normal(k3, (16, 4, 16, 16), dtype=jnp.float32))

    # 4) Deep-feature shape (what CNNNet feeds makeStyle): channel-on-lanes.
    _check(jax.random.normal(k4, (2, 128, 4, 4), dtype=jnp.float32))

    print("KERNEL_OK")
</pallas_src>

<mosaic_0001>
module attributes {stable_mosaic.version = 11 : i64} {
  func.func @_style_kernel_spatial_lanes(%arg0: i32, %arg1: i32, %arg2: memref<2x4x256xf32, #tpu.memory_space<vmem>>, %arg3: memref<2x4xf32, #tpu.memory_space<vmem>>, %arg4: memref<2x4xf32, #tpu.memory_space<vmem>>) attributes {dimension_semantics = [#tpu.dimension_semantics<parallel>, #tpu.dimension_semantics<arbitrary>], iteration_bounds = array<i64: 1, 1>, scalar_prefetch = 0 : i64, scratch_operands = 1 : i64, tpu.core_type = #tpu.core_type<tc>, window_params = [{transform_indices = @transform_0, window_bounds = array<i64: 2, 4, 256>}, {transform_indices = @transform_1, window_bounds = array<i64: 2, 4>}]} {
    %c0_i32 = arith.constant 0 : i32
    %0 = arith.cmpi eq, %arg1, %c0_i32 : i32
    %1 = arith.extui %0 : i1 to i32
    %c0_i32_0 = arith.constant 0 : i32
    %2 = arith.cmpi ne, %1, %c0_i32_0 : i32
    scf.if %2 {
      %cst_9 = arith.constant 0.000000e+00 : f32
      %11 = vector.broadcast %cst_9 : f32 to vector<2x4xf32>
      %c0_10 = arith.constant 0 : index
      %c0_11 = arith.constant 0 : index
      %12 = vector.load %arg4[%c0_10, %c0_11] : memref<2x4xf32, #tpu.memory_space<vmem>>, vector<2x4xf32>
      tpu.vector_store %arg4[%c0_10, %c0_11], %11 {strides = array<i32>} : memref<2x4xf32, #tpu.memory_space<vmem>>, vector<2x4xf32>,
    } else {
    }
    %c0 = arith.constant 0 : index
    %c0_1 = arith.constant 0 : index
    %c0_2 = arith.constant 0 : index
    %3 = vector.load %arg2[%c0, %c0_1, %c0_2] : memref<2x4x256xf32, #tpu.memory_space<vmem>>, vector<2x4x256xf32>
    %c0_3 = arith.constant 0 : index
    %c0_4 = arith.constant 0 : index
    %4 = vector.load %arg4[%c0_3, %c0_4] : memref<2x4xf32, #tpu.memory_space<vmem>>, vector<2x4xf32>
    %cst = arith.constant dense<0.000000e+00> : vector<2x4xf32>
    %5 = vector.multi_reduction <add>, %3, %cst [2] : vector<2x4x256xf32> to vector<2x4xf32>
    %6 = arith.addf %4, %5 : vector<2x4xf32>
    %c0_5 = arith.constant 0 : index
    %c0_6 = arith.constant 0 : index
    %7 = vector.load %arg4[%c0_5, %c0_6] : memref<2x4xf32, #tpu.memory_space<vmem>>, vector<2x4xf32>
    tpu.vector_store %arg4[%c0_5, %c0_6], %6 {strides = array<i32>} : memref<2x4xf32, #tpu.memory_space<vmem>>, vector<2x4xf32>,
    %c0_i32_7 = arith.constant 0 : i32
    %8 = arith.cmpi eq, %arg1, %c0_i32_7 : i32
    %9 = arith.extui %8 : i1 to i32
    %c0_i32_8 = arith.constant 0 : i32
    %10 = arith.cmpi ne, %9, %c0_i32_8 : i32
    scf.if %10 {
      %c0_9 = arith.constant 0 : index
      %c0_10 = arith.constant 0 : index
      %11 = vector.load %arg4[%c0_9, %c0_10] : memref<2x4xf32, #tpu.memory_space<vmem>>, vector<2x4xf32>
      %12 = arith.mulf %11, %11 : vector<2x4xf32>
      %cst_11 = arith.constant dense<0.000000e+00> : vector<2xf32>
      %13 = vector.multi_reduction <add>, %12, %cst_11 [1] : vector<2x4xf32> to vector<2xf32>
      %14 = vector.shape_cast %13 : vector<2xf32> to vector<2x1xf32>
      %15 = math.rsqrt %14 : vector<2x1xf32>
      %16 = vector.broadcast %15 : vector<2x1xf32> to vector<2x4xf32>
      %17 = arith.mulf %11, %16 : vector<2x4xf32>
      %c0_12 = arith.constant 0 : index
      %c0_13 = arith.constant 0 : index
      %18 = vector.load %arg3[%c0_12, %c0_13] : memref<2x4xf32, #tpu.memory_space<vmem>>, vector<2x4xf32>
      tpu.vector_store %arg3[%c0_12, %c0_13], %17 {strides = array<i32>} : memref<2x4xf32, #tpu.memory_space<vmem>>, vector<2x4xf32>,
    } else {
    }
    return
  }
  func.func @transform_0(%arg0: i32, %arg1: i32) -> (i32, i32, i32) {
    %c0_i32 = arith.constant 0 : i32
    %c0_i32_0 = arith.constant 0 : i32
    return %arg0, %c0_i32, %arg1 : i32, i32, i32
  }
  func.func @transform_1(%arg0: i32, %arg1: i32) -> (i32, i32) {
    %c0_i32 = arith.constant 0 : i32
    %c0_i32_0 = arith.constant 0 : i32
    return %arg0, %c0_i32 : i32, i32
  }
}

</mosaic_0001>

<llo_original>
// kernel: tpu_custom_call.1
$region0: #{tpu_custom_call.1}
  #allocation0 [shape = 'u32[]', space=smem, size = 0x4, offset = 0x4, fixed_abs, tag = 'smem constant byte address 0x4 - core index']
  #allocation1 [shape = 'u32[144,128]{1,0:T(1,128)}', space=vmem, size = 0x12000, scoped, tag = 'internal scratch']
  #allocation2 [shape = 'f32[2,4]{1,0:T(2,128)}', space=vmem, size = 0x400, scoped, tag = 'scratch operand']
  %s0 = inlined_call_operand.hbm [shape: f32[2,4,256], index: 0, kind: input, shape index: {}]
  %s1 = inlined_call_operand.hbm [shape: f32[2,4], index: 1, kind: output, shape index: {}]
  %s2 = sld [smem:[#allocation0]]
  $region26: #{tpu_custom_call.1} parent=0
    _
  %s4 = ssub.s32 1, %s2
  %s5 = scalar_select 0, %s4, %s2
  $region1: #{tpu_custom_call.1} parent=0
    #allocation3 [shape = 'u8[8192]{0}', space=vmem, size = 0x2000, scoped, tag = 'input window, operand 0, single buffered']
    #allocation4 [shape = 's32[1]{0}', space=sflag, size = 0x4, scoped, tag = 'scoped memory for tpu_custom_call.1']
    #allocation5 [shape = 's32[1]{0}', space=sflag, size = 0x4, scoped, tag = 'scoped memory for tpu_custom_call.1']
    #allocation6 [shape = 'u8[1024]{0}', space=vmem, size = 0x400, scoped, tag = 'output window, operand 0, single buffered']
    %6 = vsyncpa [#allocation4], 0
    %7 = vsyncpa [#allocation5], 0
    // Predicated region
    $region2: #{tpu_custom_call.1} parent=1 // pred_check
      _
    $region3: #{tpu_custom_call.1} parent=1 // pred_check_branch
      %9 = sbr.rel (0) target = $region5
    $region4: #{tpu_custom_call.1} parent=1 // pred_region
      %s11 = ssub.s32 256, 256
      %12 = vsyncadd [#allocation4], %s11
      %s13 = sshll.u32 [#allocation3], 4
      %s14 = int_to_ptr.vmem [resolvable:$true] %s13
      %19 = dma.hbm_to_vmem [thread:$0]  %s0, 256, %s14, [#allocation4], 128, 128, 8
    $region5: #{tpu_custom_call.1} parent=1 // pred_fallthru
      _
    // Predicated region
    $region6: #{tpu_custom_call.1} parent=1 // pred_check
      _
    $region7: #{tpu_custom_call.1} parent=1 // pred_check_branch
      %21 = sbr.rel (0) target = $region9
    $region8: #{tpu_custom_call.1} parent=1 // pred_region
      %22 = dma.done [#allocation4], 256
    $region9: #{tpu_custom_call.1} parent=1 // pred_fallthru
      _
    %p23 = scmp.eq.s32.totalorder 0, 0
    // Predicated region
    $region10: #{tpu_custom_call.1} parent=1 // pred_check
      %p24 = pneg %p23
    $region11: #{tpu_custom_call.1} parent=1 // pred_check_branch
      %26 = sbr.rel (%p24) target = $region13
    $region12: #{tpu_custom_call.1} parent=1 // pred_region
      %vm27 = vcmask 25600
      %28 = vst.msk [vmem:[#allocation2] sm:$0x3] %vm27, 0.0
    $region13: #{tpu_custom_call.1} parent=1 // pred_fallthru
      _
    %v29 = vld [vmem:[#allocation3] sm:$0xff]
    %v30 = vld [vmem:[#allocation3 + $0x8] sm:$0xff]
    %v31 = vld [vmem:[#allocation2] sm:$0x3]
    %v34 = vcombine.high %v29, %v29
    %v35 = vcombine.high %v30, %v30
    %vm38 = vcmask 1043456
    %v39 = vsel %vm38, %v29, 0.0
    %v40 = vsel %vm38, %v34, 0.0
    %v41 = vadd.f32 %v39, %v40
    %42 = vadd.xlane.f32.xlu0 %v41
    %v43 = vpop.xlane.xlu0 %42
    %v44 = vsel %vm38, %v30, 0.0
    %v45 = vsel %vm38, %v35, 0.0
    %v46 = vadd.f32 %v44, %v45
    %47 = vadd.xlane.f32.xlu0 %v46
    %v48 = vpop.xlane.xlu0 %47
    %v51 = vlaneseq
    %v52 = vand.u32 %v51, 127
    %v53 = vlaneseq
    %v54 = vshrl.u32 %v53, 7
    %v55 = vsub.s32 %v52, %v54
    %v56 = vrot.slane %v43, %v55
    %v57 = vlaneseq
    %v58 = vshrl.u32 %v57, 7
    %v59 = vsub.s32 %v52, %v58
    %v60 = vrot.slane %v48, %v59
    %vm61 = vcmask 1041409
    %v62 = vsel %vm61, %v60, %v56
    %v64 = vadd.f32 %v31, %v62
    %vm65 = vcmask 25600
    %66 = vst.msk [vmem:[#allocation2] sm:$0x3] %vm65, %v64
    // Predicated region
    $region14: #{tpu_custom_call.1} parent=1 // pred_check
      %p67 = pneg %p23
    $region15: #{tpu_custom_call.1} parent=1 // pred_check_branch
      %69 = sbr.rel (%p67) target = $region17
    $region16: #{tpu_custom_call.1} parent=1 // pred_region
      %v70 = vld [vmem:[#allocation2] sm:$0x3]
      %v71 = vmul.f32 %v70, %v70
      %v72 = vsel %vm65, %v71, 0.0
      %73 = vadd.xlane.f32.xlu0 %v72
      %v74 = vpop.xlane.xlu0 %73
      %v75 = vrsqrt.pop %v74
      %v76 = vmul.f32 %v70, %v75
      %77 = vst.msk [vmem:[#allocation6] sm:$0x3] %vm65, %v76
    $region17: #{tpu_custom_call.1} parent=1 // pred_fallthru
      _
    // Predicated region
    $region18: #{tpu_custom_call.1} parent=1 // pred_check
      _
    $region19: #{tpu_custom_call.1} parent=1 // pred_check_branch
      %79 = sbr.rel (0) target = $region21
    $region20: #{tpu_custom_call.1} parent=1 // pred_region
      %s81 = ssub.s32 32, 32
      %82 = vsyncadd [#allocation5], %s81
      %s84 = sshll.u32 [#allocation6], 4
      %s85 = int_to_ptr.vmem [resolvable:$true] %s84
      %87 = dma.vmem_to_hbm [thread:$0]  %s85, 32, %s1, [#allocation5]
    $region21: #{tpu_custom_call.1} parent=1 // pred_fallthru
      _
    // Predicated region
    $region22: #{tpu_custom_call.1} parent=1 // pred_check
      _
    $region23: #{tpu_custom_call.1} parent=1 // pred_check_branch
      %89 = sbr.rel (0) target = $region25
    $region24: #{tpu_custom_call.1} parent=1 // pred_region
      %90 = dma.done [#allocation5], 32
    $region25: #{tpu_custom_call.1} parent=1 // pred_fallthru
      _
    %91 = vsyncpa [#allocation4], 1
    %92 = vsyncpa [#allocation5], 1

</llo_original>
